<compile_context>
chip_gen: v6e
topology: v6e:2x2x1
jax: 0.10.0
libtpu: 0.0.40
codegen_flags: <defaults>
</compile_context>

<pallas_src>
import functools
import math

import jax
import jax.numpy as jnp
from jax.experimental import pallas as pl
from jax.experimental.pallas import tpu as pltpu


# ---------------------------------------------------------------------------
# Kernel body: one (batch, head-tile, Lq-tile) grid step.
# ---------------------------------------------------------------------------
def _sdpa_kernel(q_ref, k_ref, v_ref, ctx_ref, attn_ref, *, scale: float):
    # Block shapes: q (1, th, tq, d_k), k (1, th, Lk, d_k), v (1, th, Lk, d_v),
    #               ctx (1, th, tq, d_v), attn (1, th, tq, Lk)

    # Fold 1/sqrt(d_k) into the small Q tile (th*tq*d_k multiplies instead of
    # th*tq*Lk on the score matrix).
    q = (q_ref[0] * scale).astype(q_ref.dtype)     # (th, tq, d_k)
    k = k_ref[0]                                   # (th, Lk, d_k)
    v = v_ref[0]                                   # (th, Lk, d_v)

    # scores[h, q, k] = sum_d q[h, q, d] * k[h, k, d]
    # Head axis batched, d_k contracted — no materialized K transpose.
    # MXU consumes the input dtype; accumulation is f32.
    scores = jax.lax.dot_general(
        q, k,
        dimension_numbers=(((2,), (2,)), ((0,), (0,))),
        preferred_element_type=jnp.float32,
    )                                              # (th, tq, Lk) f32

    # Numerically stable softmax along the key axis (f32).  The reciprocal is
    # exact and only computed on the tiny (th, tq, 1) denominator, then
    # broadcast-multiplied — so the returned attn rows sum to 1 exactly.
    m = jnp.max(scores, axis=-1, keepdims=True)
    e = jnp.exp(scores - m)
    denom = jnp.sum(e, axis=-1, keepdims=True)
    inv = 1.0 / denom                              # (th, tq, 1) f32, exact
    p = e * inv                                    # (th, tq, Lk) f32

    # context[h, q, d] = sum_k p[h, q, k] * v[h, k, d]
    # Probabilities cast back to V's dtype (bf16-fast MXU path when inputs are
    # bf16); accumulation stays f32.
    ctx = jax.lax.dot_general(
        p.astype(v.dtype), v,
        dimension_numbers=(((2,), (1,)), ((0,), (0,))),
        preferred_element_type=jnp.float32,
    )                                              # (th, tq, d_v) f32

    attn_ref[0] = p.astype(attn_ref.dtype)
    ctx_ref[0] = ctx.astype(ctx_ref.dtype)


# ---------------------------------------------------------------------------
# Resource sizing helpers.
# ---------------------------------------------------------------------------
def _pad(n: int, m: int) -> int:
    return ((n + m - 1) // m) * m


def _vmem_limit_bytes() -> int:
    """Generation-aware scoped-VMEM request with headroom."""
    cap = 64 * 1024 * 1024  # conservative fallback: v7x physical VMEM per TC
    try:
        info = pltpu.get_tpu_info()
        cap = int(getattr(info, "vmem_capacity_bytes", cap) or cap)
    except Exception:
        pass
    # Leave ~25% headroom for compiler-internal scratch; never ask for more
    # than ~100 MiB even on 128 MiB parts.
    return min(int(cap * 0.75), 100 * 1024 * 1024)


def _tq_candidates(lq: int):
    """Legal Lq tile sizes, largest first: multiples of 8 dividing Lq (<=512),
    plus the full extent (always legal) as a fallback."""
    cands = [t for t in range(512, 0, -8) if t <= lq and lq % t == 0]
    if lq <= 512 and lq not in cands:
        cands = [lq] + cands
    if not cands:
        cands = [lq]
    return cands


def _th_candidates(h: int):
    return [d for d in range(h, 0, -1) if h % d == 0]


def _choose_tiles(H, Lq, Lk, d_k, d_v, in_itemsize, attn_itemsize, budget):
    """Pick (th, tq) so the per-step VMEM footprint fits `budget`.

    Accounts for lane padding (last dims < 128 pad to 128 lanes), the default
    2x double-buffering of every pipelined block, and ~2 live f32 (th,tq,Lk)
    softmax intermediates.  Prefers a large tq (MXU shape), then a larger th.
    """
    dkp, dvp = _pad(d_k, 128), _pad(d_v, 128)
    lk_lane = _pad(Lk, 128)   # Lk as a lane (last) dim: scores / attn block
    lk_sub = _pad(Lk, 8)      # Lk as a sublane dim: K / V blocks

    def footprint(th, tq):
        tqp = _pad(tq, 8)
        kv = th * lk_sub * (dkp + dvp) * in_itemsize * 2          # K, V (x2 buf)
        qb = th * tqp * dkp * in_itemsize * 2                     # Q
        ctxb = th * tqp * dvp * in_itemsize * 2                   # ctx out
        attb = th * tqp * lk_lane * attn_itemsize * 2             # attn out
        tmp = 2 * th * tqp * lk_lane * 4                          # f32 scores/e/p
        return kv + qb + ctxb + attb + tmp

    for tq in _tq_candidates(Lq):
        for th in _th_candidates(H):
            if footprint(th, tq) <= budget:
                return th, tq
    # Nothing fits even at (1, smallest tq): fall back to the smallest legal
    # configuration.  TODO(synk): flash-style Lk tiling would be needed here.
    return 1, _tq_candidates(Lq)[-1]


# ---------------------------------------------------------------------------
# Public wrapper.
# ---------------------------------------------------------------------------
def scaled_dot_product_attention(Q, K, V, *, compute_dtype=None, attn_dtype=None):
    """Pallas TPU implementation of ScaledDotProductAttention.forward.

    Q: [B, H, Lq, d_k], K: [B, H, Lk, d_k], V: [B, H, Lk, d_v]
    Returns (context [B, H, Lq, d_v], attn [B, H, Lq, Lk]).

    compute_dtype: optionally cast Q/K/V (e.g. jnp.bfloat16) before the kernel
                   for the fast MXU path; accumulation stays f32.
    attn_dtype:    optionally store the attention matrix in a narrower dtype
                   (e.g. jnp.bfloat16) to halve the dominant HBM writeback.
    Defaults preserve the module semantics (everything in the caller's dtype).
    """
    out_dtype = Q.dtype
    if compute_dtype is not None:
        Q = Q.astype(compute_dtype)
        K = K.astype(compute_dtype)
        V = V.astype(compute_dtype)
    attn_out_dtype = attn_dtype if attn_dtype is not None else out_dtype

    B, H, Lq, d_k = Q.shape
    _, _, Lk, _ = K.shape
    d_v = V.shape[-1]

    scale = 1.0 / math.sqrt(d_k)
    kernel = functools.partial(_sdpa_kernel, scale=scale)

    vmem_limit = _vmem_limit_bytes()
    budget = int(vmem_limit * 0.7)  # keep slack for compiler scratch / spills

    in_itemsize = jnp.dtype(Q.dtype).itemsize
    attn_itemsize = jnp.dtype(attn_out_dtype).itemsize
    th, tq = _choose_tiles(H, Lq, Lk, d_k, d_v, in_itemsize, attn_itemsize, budget)

    grid = (B, pl.cdiv(H, th), pl.cdiv(Lq, tq))

    in_specs = [
        pl.BlockSpec((1, th, tq, d_k), lambda b, h, i: (b, h, i, 0)),
        pl.BlockSpec((1, th, Lk, d_k), lambda b, h, i: (b, h, 0, 0)),
        pl.BlockSpec((1, th, Lk, d_v), lambda b, h, i: (b, h, 0, 0)),
    ]
    out_specs = [
        pl.BlockSpec((1, th, tq, d_v), lambda b, h, i: (b, h, i, 0)),
        pl.BlockSpec((1, th, tq, Lk), lambda b, h, i: (b, h, i, 0)),
    ]
    out_shape = [
        jax.ShapeDtypeStruct((B, H, Lq, d_v), out_dtype),
        jax.ShapeDtypeStruct((B, H, Lq, Lk), attn_out_dtype),
    ]

    cost = pl.CostEstimate(
        flops=2 * B * H * Lq * Lk * (d_k + d_v),
        transcendentals=B * H * Lq * Lk,
        bytes_accessed=(Q.size + K.size + V.size) * in_itemsize
        + B * H * Lq * d_v * jnp.dtype(out_dtype).itemsize
        + B * H * Lq * Lk * attn_itemsize,
    )

    return pl.pallas_call(
        kernel,
        grid=grid,
        in_specs=in_specs,
        out_specs=out_specs,
        out_shape=out_shape,
        cost_estimate=cost,
        compiler_params=pltpu.CompilerParams(
            dimension_semantics=("parallel", "parallel", "parallel"),
            vmem_limit_bytes=vmem_limit,
        ),
    )(Q, K, V)


# ---------------------------------------------------------------------------
# Pure-JAX reference + demo.
# ---------------------------------------------------------------------------
def _reference(Q, K, V, d_k):
    scores = jnp.matmul(Q, jnp.swapaxes(K, -1, -2)) / math.sqrt(d_k)
    attn = jax.nn.softmax(scores, axis=-1)
    ctx = jnp.matmul(attn, V)
    return ctx, attn


if __name__ == "__main__":
    # Small shapes consistent with the module: batch=2, heads=4, seq=8, d_k=d_v=32
    B, H, L, D_K, D_V = 2, 4, 8, 32, 32

    key = jax.random.PRNGKey(0)
    kq, kk, kv = jax.random.split(key, 3)
    Q = jax.random.normal(kq, (B, H, L, D_K), dtype=jnp.float32)
    K = jax.random.normal(kk, (B, H, L, D_K), dtype=jnp.float32)
    V = jax.random.normal(kv, (B, H, L, D_V), dtype=jnp.float32)

    ctx, attn = scaled_dot_product_attention(Q, K, V)
    jax.block_until_ready((ctx, attn))

    # Correctness check against a pure-JAX reference (softmax denominator is
    # now an exact reciprocal, so tolerances are tight).
    ctx_ref, attn_ref = _reference(Q, K, V, D_K)
    assert jnp.allclose(ctx, ctx_ref, atol=1e-4, rtol=1e-4), "context mismatch"
    assert jnp.allclose(attn, attn_ref, atol=1e-4, rtol=1e-4), "attn mismatch"
    assert jnp.allclose(jnp.sum(attn, axis=-1), 1.0, atol=1e-5), "attn rows not normalized"

    print("KERNEL_OK")
</pallas_src>

<mosaic_0001>
module attributes {stable_mosaic.version = 11 : i64} {
  func.func @_sdpa_kernel(%arg0: i32, %arg1: i32, %arg2: i32, %arg3: memref<1x4x8x32xf32, #tpu.memory_space<vmem>>, %arg4: memref<1x4x8x32xf32, #tpu.memory_space<vmem>>, %arg5: memref<1x4x8x32xf32, #tpu.memory_space<vmem>>, %arg6: memref<1x4x8x32xf32, #tpu.memory_space<vmem>>, %arg7: memref<1x4x8x8xf32, #tpu.memory_space<vmem>>) attributes {dimension_semantics = [#tpu.dimension_semantics<parallel>, #tpu.dimension_semantics<parallel>, #tpu.dimension_semantics<parallel>], iteration_bounds = array<i64: 2, 1, 1>, scalar_prefetch = 0 : i64, scratch_operands = 0 : i64, tpu.core_type = #tpu.core_type<tc>, window_params = [{transform_indices = @transform_0, window_bounds = array<i64: 1, 4, 8, 32>}, {transform_indices = @transform_1, window_bounds = array<i64: 1, 4, 8, 32>}, {transform_indices = @transform_2, window_bounds = array<i64: 1, 4, 8, 32>}, {transform_indices = @transform_3, window_bounds = array<i64: 1, 4, 8, 32>}, {transform_indices = @transform_4, window_bounds = array<i64: 1, 4, 8, 8>}]} {
    %c0 = arith.constant 0 : index
    %c0_0 = arith.constant 0 : index
    %c0_1 = arith.constant 0 : index
    %c0_2 = arith.constant 0 : index
    %0 = vector.load %arg3[%c0, %c0_0, %c0_1, %c0_2] : memref<1x4x8x32xf32, #tpu.memory_space<vmem>>, vector<1x4x8x32xf32>
    %1 = vector.shape_cast %0 : vector<1x4x8x32xf32> to vector<4x8x32xf32>
    %cst = arith.constant 0.176776692 : f32
    %2 = vector.broadcast %cst : f32 to vector<4x8x32xf32>
    %3 = arith.mulf %1, %2 : vector<4x8x32xf32>
    %c0_3 = arith.constant 0 : index
    %c0_4 = arith.constant 0 : index
    %c0_5 = arith.constant 0 : index
    %c0_6 = arith.constant 0 : index
    %4 = vector.load %arg4[%c0_3, %c0_4, %c0_5, %c0_6] : memref<1x4x8x32xf32, #tpu.memory_space<vmem>>, vector<1x4x8x32xf32>
    %5 = vector.shape_cast %4 : vector<1x4x8x32xf32> to vector<4x8x32xf32>
    %c0_7 = arith.constant 0 : index
    %c0_8 = arith.constant 0 : index
    %c0_9 = arith.constant 0 : index
    %c0_10 = arith.constant 0 : index
    %6 = vector.load %arg5[%c0_7, %c0_8, %c0_9, %c0_10] : memref<1x4x8x32xf32, #tpu.memory_space<vmem>>, vector<1x4x8x32xf32>
    %7 = vector.shape_cast %6 : vector<1x4x8x32xf32> to vector<4x8x32xf32>
    %cst_11 = arith.constant dense<0.000000e+00> : vector<4x8x8xf32>
    %8 = tpu.matmul %3, %5, %cst_11 {dimension_numbers = #tpu.dot_dimension_numbers<[2], [2], [1], [1], [0, 0, 0, 1, 1, 1], [0], [0]>} : vector<4x8x32xf32>, vector<4x8x32xf32>, vector<4x8x8xf32> -> vector<4x8x8xf32>
    %cst_12 = arith.constant dense<0xFF800000> : vector<4x8xf32>
    %9 = vector.multi_reduction <maximumf>, %8, %cst_12 [2] : vector<4x8x8xf32> to vector<4x8xf32>
    %10 = vector.shape_cast %9 : vector<4x8xf32> to vector<4x8x1xf32>
    %11 = vector.broadcast %10 : vector<4x8x1xf32> to vector<4x8x8xf32>
    %12 = arith.subf %8, %11 : vector<4x8x8xf32>
    %13 = math.exp %12 : vector<4x8x8xf32>
    %cst_13 = arith.constant dense<0.000000e+00> : vector<4x8xf32>
    %14 = vector.multi_reduction <add>, %13, %cst_13 [2] : vector<4x8x8xf32> to vector<4x8xf32>
    %15 = vector.shape_cast %14 : vector<4x8xf32> to vector<4x8x1xf32>
    %cst_14 = arith.constant 1.000000e+00 : f32
    %16 = vector.broadcast %cst_14 : f32 to vector<4x8x1xf32>
    %17 = arith.divf %16, %15 : vector<4x8x1xf32>
    %18 = vector.broadcast %17 : vector<4x8x1xf32> to vector<4x8x8xf32>
    %19 = arith.mulf %13, %18 : vector<4x8x8xf32>
    %cst_15 = arith.constant dense<0.000000e+00> : vector<4x8x32xf32>
    %20 = tpu.matmul %19, %7, %cst_15 {dimension_numbers = #tpu.dot_dimension_numbers<[2], [1], [1], [2], [0, 0, 0, 1, 1, 2], [0], [0]>} : vector<4x8x8xf32>, vector<4x8x32xf32>, vector<4x8x32xf32> -> vector<4x8x32xf32>
    %c0_16 = arith.constant 0 : index
    %c0_17 = arith.constant 0 : index
    %c0_18 = arith.constant 0 : index
    %c0_19 = arith.constant 0 : index
    %21 = vector.load %arg7[%c0_16, %c0_17, %c0_18, %c0_19] : memref<1x4x8x8xf32, #tpu.memory_space<vmem>>, vector<1x4x8x8xf32>
    %22 = vector.shape_cast %21 : vector<1x4x8x8xf32> to vector<4x8x8xf32>
    %23 = vector.shape_cast %19 : vector<4x8x8xf32> to vector<1x4x8x8xf32>
    tpu.vector_store %arg7[%c0_16, %c0_17, %c0_18, %c0_19], %23 {strides = array<i32>} : memref<1x4x8x8xf32, #tpu.memory_space<vmem>>, vector<1x4x8x8xf32>,
    %c0_20 = arith.constant 0 : index
    %c0_21 = arith.constant 0 : index
    %c0_22 = arith.constant 0 : index
    %c0_23 = arith.constant 0 : index
    %24 = vector.load %arg6[%c0_20, %c0_21, %c0_22, %c0_23] : memref<1x4x8x32xf32, #tpu.memory_space<vmem>>, vector<1x4x8x32xf32>
    %25 = vector.shape_cast %24 : vector<1x4x8x32xf32> to vector<4x8x32xf32>
    %26 = vector.shape_cast %20 : vector<4x8x32xf32> to vector<1x4x8x32xf32>
    tpu.vector_store %arg6[%c0_20, %c0_21, %c0_22, %c0_23], %26 {strides = array<i32>} : memref<1x4x8x32xf32, #tpu.memory_space<vmem>>, vector<1x4x8x32xf32>,
    return
  }
  func.func @transform_0(%arg0: i32, %arg1: i32, %arg2: i32) -> (i32, i32, i32, i32) {
    %c0_i32 = arith.constant 0 : i32
    %c0_i32_0 = arith.constant 0 : i32
    return %arg0, %arg1, %arg2, %c0_i32 : i32, i32, i32, i32
  }
  func.func @transform_1(%arg0: i32, %arg1: i32, %arg2: i32) -> (i32, i32, i32, i32) {
    %c0_i32 = arith.constant 0 : i32
    %c0_i32_0 = arith.constant 0 : i32
    %c0_i32_1 = arith.constant 0 : i32
    return %arg0, %arg1, %c0_i32, %c0_i32_0 : i32, i32, i32, i32
  }
  func.func @transform_2(%arg0: i32, %arg1: i32, %arg2: i32) -> (i32, i32, i32, i32) {
    %c0_i32 = arith.constant 0 : i32
    %c0_i32_0 = arith.constant 0 : i32
    %c0_i32_1 = arith.constant 0 : i32
    return %arg0, %arg1, %c0_i32, %c0_i32_0 : i32, i32, i32, i32
  }
  func.func @transform_3(%arg0: i32, %arg1: i32, %arg2: i32) -> (i32, i32, i32, i32) {
    %c0_i32 = arith.constant 0 : i32
    %c0_i32_0 = arith.constant 0 : i32
    return %arg0, %arg1, %arg2, %c0_i32 : i32, i32, i32, i32
  }
  func.func @transform_4(%arg0: i32, %arg1: i32, %arg2: i32) -> (i32, i32, i32, i32) {
    %c0_i32 = arith.constant 0 : i32
    %c0_i32_0 = arith.constant 0 : i32
    return %arg0, %arg1, %arg2, %c0_i32 : i32, i32, i32, i32
  }
}

</mosaic_0001>

<llo_original>
// kernel: tpu_custom_call.1
$region0: #{tpu_custom_call.1}
  #allocation0 [shape = 'u32[]', space=smem, size = 0x4, offset = 0x4, fixed_abs, tag = 'smem constant byte address 0x4 - core index']
  #allocation1 [shape = 'u32[144,128]{1,0:T(1,128)}', space=vmem, size = 0x12000, scoped, tag = 'internal scratch']
  %s0 = inlined_call_operand.hbm [shape: f32[2,4,8,32], index: 0, kind: input, shape index: {}]
  %s1 = inlined_call_operand.hbm [shape: f32[2,4,8,32], index: 1, kind: input, shape index: {}]
  %s2 = inlined_call_operand.hbm [shape: f32[2,4,8,32], index: 2, kind: input, shape index: {}]
  %s3 = inlined_call_operand.hbm [shape: f32[2,4,8,32], index: 3, kind: output, shape index: {0}]
  %s4 = inlined_call_operand.hbm [shape: f32[2,4,8,8], index: 4, kind: output, shape index: {1}]
  %5 = xla_tuple %s3, %s4
  %s6 = sld [smem:[#allocation0]]
  $region65: #{tpu_custom_call.1} parent=0
    _
  %s8 = ssub.s32 1, %s6
  %s9 = scalar_select 0, %s8, %s6
  $region1: #{tpu_custom_call.1} parent=0
    #allocation2 [shape = 'u8[32768]{0}', space=vmem, size = 0x8000, scoped, tag = 'input window, operand 0']
    #allocation3 [shape = 's32[2]{0}', space=sflag, size = 0x8, scoped, tag = 'scoped memory for tpu_custom_call.1']
    #allocation4 [shape = 's32[2]{0}', space=sflag, size = 0x8, scoped, tag = 'scoped memory for tpu_custom_call.1']
    #allocation5 [shape = 'u8[32768]{0}', space=vmem, size = 0x8000, scoped, tag = 'input window, operand 1']
    #allocation6 [shape = 's32[2]{0}', space=sflag, size = 0x8, scoped, tag = 'scoped memory for tpu_custom_call.1']
    #allocation7 [shape = 'u8[32768]{0}', space=vmem, size = 0x8000, scoped, tag = 'input window, operand 2']
    #allocation8 [shape = 'u8[32768]{0}', space=vmem, size = 0x8000, scoped, tag = 'output window, operand 0']
    #allocation9 [shape = 'u8[32768]{0}', space=vmem, size = 0x8000, scoped, tag = 'output window, operand 1']
    #allocation10 [shape = 's32[2]{0}', space=sflag, size = 0x8, scoped, tag = 'scoped memory for tpu_custom_call.1']
    %10 = vsyncpa [#allocation3], 0
    %s11 = scalar_lea.sflag [#allocation3], 1
    %12 = vsyncpa %s11, 0
    %13 = vsyncpa [#allocation6], 0
    %s14 = scalar_lea.sflag [#allocation6], 1
    %15 = vsyncpa %s14, 0
    %16 = vsyncpa [#allocation4], 0
    %s17 = scalar_lea.sflag [#allocation4], 1
    %18 = vsyncpa %s17, 0
    %19 = vsyncpa [#allocation10], 0
    %s20 = scalar_lea.sflag [#allocation10], 1
    %21 = vsyncpa %s20, 0
    loop: start=0, step=1, limit=4
    $region2: #{tpu_custom_call.1} parent=1 // loop_pre_header
      _
    $region3: #{tpu_custom_call.1} parent=1 // loop_header
      %s23 = sphi 0, %s27
      %p24 = scmp.ge.s32.totalorder %s23, 4
      %s30 = sphi 0, %s49
      %s31 = sphi 0, %s45
      %s32 = sphi 0, %s41
      %s33 = sphi 0, %s30
      %s34 = sphi 0, %s31
      %s35 = sphi 0, %s32
      %s36 = sphi 0, %s33
      %s37 = sphi 0, %s34
      %s38 = sphi 0, %s35
      %s56 = sphi 0, %s58
      %s59 = sphi 0, %s56
      %s60 = sphi 0, %s59
      %s76 = sphi 0, %s60
      %s84 = sphi 0, %s86
      %s87 = sphi 0, %s84
      %s88 = sphi 0, %s87
      %s104 = sphi 0, %s88
      %s112 = sphi 0, %s114
      %s115 = sphi 0, %s112
      %s116 = sphi 0, %s115
      %s132 = sphi 0, %s116
      %s142 = sphi 0, %s144
      %s145 = sphi 0, %s142
      %s146 = sphi 0, %s145
      %s162 = sphi 0, %s146
      %s172 = sphi 0, %s174
      %s175 = sphi 0, %s172
      %s176 = sphi 0, %s175
      %s192 = sphi 0, %s176
    $region4: #{tpu_custom_call.1} parent=1 // loop_header_branch
      %26 = sbr.rel (%p24) target = $region8
    $region5: #{tpu_custom_call.1} parent=1 // loop_body
      %s28 = ssub.s32 %s23, 1
      %s29 = ssub.s32 %s23, 2
      %s39 = sadd.s32 1, %s32
      %p40 = scmp.ge.s32.totalorder %s39, 1
      %s41 = scalar_select %p40, 0, %s39
      %s42 = sadd.s32 1, %s31
      %s43 = scalar_select %p40, %s42, %s31
      %p44 = scmp.ge.s32.totalorder %s43, 1
      %s45 = scalar_select %p44, 0, %s43
      %s46 = sadd.s32 1, %s30
      %s47 = scalar_select %p44, %s46, %s30
      %p48 = scmp.ge.s32.totalorder %s47, 2
      %s49 = scalar_select %p48, 0, %s47
      %s50 = ssub.s32 %s30, %s49
      %s51 = ssub.s32 %s31, %s45
      %s52 = sor.u32 %s50, %s51
      %s53 = ssub.s32 %s32, %s41
      %s54 = sor.u32 %s52, %s53
      %p55 = scmp.eq.s32.totalorder %s54, 0
      %s57 = sadd.s32 %s56, 1
      %s58 = scalar_select %p55, %s56, %s57
      %p61 = pneg %p55
      %p62 = scmp.eq.s32.totalorder %s23, 1
      %p63 = por %p61, %p62
      %p64 = scmp.ne.s32.totalorder %s56, %s59
      %p65 = scmp.eq.s32.totalorder %s23, 0
      %p66 = por %p64, %p65
      %p67 = scmp.ne.s32.totalorder %s56, %s59
      %p68 = scmp.eq.s32.totalorder %s28, 1
      %p69 = por %p67, %p68
      %p70 = scmp.ne.s32.totalorder %s59, %s60
      %p71 = scmp.eq.s32.totalorder %s28, 0
      %p72 = por %p70, %p71
      %p73 = scmp.ne.s32.totalorder %s59, %s60
      %p74 = scmp.eq.s32.totalorder %s29, 1
      %p75 = por %p73, %p74
      %p77 = scmp.ne.s32.totalorder %s60, %s76
      %p78 = scmp.eq.s32.totalorder %s29, 0
      %p79 = por %p77, %p78
      %s80 = ssub.s32 %s30, %s49
      %s81 = ssub.s32 %s31, %s45
      %s82 = sor.u32 %s80, %s81
      %p83 = scmp.eq.s32.totalorder %s82, 0
      %s85 = sadd.s32 %s84, 1
      %s86 = scalar_select %p83, %s84, %s85
      %p89 = pneg %p83
      %p90 = scmp.eq.s32.totalorder %s23, 1
      %p91 = por %p89, %p90
      %p92 = scmp.ne.s32.totalorder %s84, %s87
      %p93 = scmp.eq.s32.totalorder %s23, 0
      %p94 = por %p92, %p93
      %p95 = scmp.ne.s32.totalorder %s84, %s87
      %p96 = scmp.eq.s32.totalorder %s28, 1
      %p97 = por %p95, %p96
      %p98 = scmp.ne.s32.totalorder %s87, %s88
      %p99 = scmp.eq.s32.totalorder %s28, 0
      %p100 = por %p98, %p99
      %p101 = scmp.ne.s32.totalorder %s87, %s88
      %p102 = scmp.eq.s32.totalorder %s29, 1
      %p103 = por %p101, %p102
      %p105 = scmp.ne.s32.totalorder %s88, %s104
      %p106 = scmp.eq.s32.totalorder %s29, 0
      %p107 = por %p105, %p106
      %s108 = ssub.s32 %s30, %s49
      %s109 = ssub.s32 %s31, %s45
      %s110 = sor.u32 %s108, %s109
      %p111 = scmp.eq.s32.totalorder %s110, 0
      %s113 = sadd.s32 %s112, 1
      %s114 = scalar_select %p111, %s112, %s113
      %p117 = pneg %p111
      %p118 = scmp.eq.s32.totalorder %s23, 1
      %p119 = por %p117, %p118
      %p120 = scmp.ne.s32.totalorder %s112, %s115
      %p121 = scmp.eq.s32.totalorder %s23, 0
      %p122 = por %p120, %p121
      %p123 = scmp.ne.s32.totalorder %s112, %s115
      %p124 = scmp.eq.s32.totalorder %s28, 1
      %p125 = por %p123, %p124
      %p126 = scmp.ne.s32.totalorder %s115, %s116
      %p127 = scmp.eq.s32.totalorder %s28, 0
      %p128 = por %p126, %p127
      %p129 = scmp.ne.s32.totalorder %s115, %s116
      %p130 = scmp.eq.s32.totalorder %s29, 1
      %p131 = por %p129, %p130
      %p133 = scmp.ne.s32.totalorder %s116, %s132
      %p134 = scmp.eq.s32.totalorder %s29, 0
      %p135 = por %p133, %p134
      %s136 = ssub.s32 %s30, %s49
      %s137 = ssub.s32 %s31, %s45
      %s138 = sor.u32 %s136, %s137
      %s139 = ssub.s32 %s32, %s41
      %s140 = sor.u32 %s138, %s139
      %p141 = scmp.eq.s32.totalorder %s140, 0
      %s143 = sadd.s32 %s142, 1
      %s144 = scalar_select %p141, %s142, %s143
      %p147 = pneg %p141
      %p148 = scmp.eq.s32.totalorder %s23, 1
      %p149 = por %p147, %p148
      %p150 = scmp.ne.s32.totalorder %s142, %s145
      %p151 = scmp.eq.s32.totalorder %s23, 0
      %p152 = por %p150, %p151
      %p153 = scmp.ne.s32.totalorder %s142, %s145
      %p154 = scmp.eq.s32.totalorder %s28, 1
      %p155 = por %p153, %p154
      %p156 = scmp.ne.s32.totalorder %s145, %s146
      %p157 = scmp.eq.s32.totalorder %s28, 0
      %p158 = por %p156, %p157
      %p159 = scmp.ne.s32.totalorder %s145, %s146
      %p160 = scmp.eq.s32.totalorder %s29, 1
      %p161 = por %p159, %p160
      %p163 = scmp.ne.s32.totalorder %s146, %s162
      %p164 = scmp.eq.s32.totalorder %s29, 0
      %p165 = por %p163, %p164
      %s166 = ssub.s32 %s30, %s49
      %s167 = ssub.s32 %s31, %s45
      %s168 = sor.u32 %s166, %s167
      %s169 = ssub.s32 %s32, %s41
      %s170 = sor.u32 %s168, %s169
      %p171 = scmp.eq.s32.totalorder %s170, 0
      %s173 = sadd.s32 %s172, 1
      %s174 = scalar_select %p171, %s172, %s173
      %p177 = pneg %p171
      %p178 = scmp.eq.s32.totalorder %s23, 1
      %p179 = por %p177, %p178
      %p180 = scmp.ne.s32.totalorder %s172, %s175
      %p181 = scmp.eq.s32.totalorder %s23, 0
      %p182 = por %p180, %p181
      %p183 = scmp.ne.s32.totalorder %s172, %s175
      %p184 = scmp.eq.s32.totalorder %s28, 1
      %p185 = por %p183, %p184
      %p186 = scmp.ne.s32.totalorder %s175, %s176
      %p187 = scmp.eq.s32.totalorder %s28, 0
      %p188 = por %p186, %p187
      %p189 = scmp.ne.s32.totalorder %s175, %s176
      %p190 = scmp.eq.s32.totalorder %s29, 1
      %p191 = por %p189, %p190
      %p193 = scmp.ne.s32.totalorder %s176, %s192
      %p194 = scmp.eq.s32.totalorder %s29, 0
      %p195 = por %p193, %p194
      %p196 = scmp.le.s32.totalorder 1, %s23
      %p197 = scmp.lt.s32.totalorder %s23, 3
      %p198 = pnand %p196, %p197
      %p199 = pneg %p198
      // Predicated region
      $region9: #{tpu_custom_call.1} parent=5 // pred_check
        _
      $region10: #{tpu_custom_call.1} parent=5 // pred_check_branch
        %201 = sbr.rel (%p198) target = $region12
      $region11: #{tpu_custom_call.1} parent=5 // pred_region
        %s202 = ssub.s32 %s23, 1
      $region12: #{tpu_custom_call.1} parent=5 // pred_fallthru
        _
      %p203 = scmp.lt.s32.totalorder %s23, 2
      // Predicated region
      $region13: #{tpu_custom_call.1} parent=5 // pred_check
        %p204 = pneg %p203
      $region14: #{tpu_custom_call.1} parent=5 // pred_check_branch
        %206 = sbr.rel (%p204) target = $region16
      $region15: #{tpu_custom_call.1} parent=5 // pred_region
        // Predicated region
        $region17: #{tpu_custom_call.1} parent=15 // pred_check
          %p207 = pneg %p66
        $region18: #{tpu_custom_call.1} parent=15 // pred_check_branch
          %209 = sbr.rel (%p207) target = $region20
        $region19: #{tpu_custom_call.1} parent=15 // pred_region
          %s210 = sand.u32 %s56, 1
          %s211 = scalar_lea.sflag [#allocation3], %s210
          %s212 = sand.u32 %s56, 1
          %s213 = smul.addr %s212, 32
          %s214 = scalar_lea.vmem [#allocation2], %s213
          %s215 = smul.u32 4, %s31
          %s217 = ssub.s32 512, 512
          %218 = vsyncadd %s211, %s217
          %s219 = sadd.s32 %s32, %s215
          %s220 = smul.addr %s30, 4
          %s221 = sadd.s32 %s219, %s220
          %s222 = smul.addr %s221, 128
          %s223 = scalar_lea.hbm %s0, %s222
          %s224 = sshll.u32 %s214, 4
          %s225 = int_to_ptr.vmem [resolvable:$true] %s224
          %230 = dma.hbm_to_vmem [thread:$0]  %s223, 512, %s225, %s211, 128, 128, 8
        $region20: #{tpu_custom_call.1} parent=15 // pred_fallthru
          _
        // Predicated region
        $region21: #{tpu_custom_call.1} parent=15 // pred_check
          %p231 = pneg %p94
        $region22: #{tpu_custom_call.1} parent=15 // pred_check_branch
          %233 = sbr.rel (%p231) target = $region24
        $region23: #{tpu_custom_call.1} parent=15 // pred_region
          %s234 = sand.u32 %s23, 1
          %s235 = scalar_lea.sflag [#allocation6], %s234
          %s236 = sand.u32 %s84, 1
          %s237 = smul.addr %s236, 32
          %s238 = scalar_lea.vmem [#allocation5], %s237
          %s239 = smul.u32 4, %s31
          %s241 = ssub.s32 512, 512
          %242 = vsyncadd %s235, %s241
          %s243 = smul.addr %s30, 4
          %s244 = sadd.s32 %s239, %s243
          %s245 = smul.addr %s244, 128
          %s246 = scalar_lea.hbm %s1, %s245
          %s247 = sshll.u32 %s238, 4
          %s248 = int_to_ptr.vmem [resolvable:$true] %s247
          %253 = dma.hbm_to_vmem [thread:$0]  %s246, 512, %s248, %s235, 128, 128, 8
        $region24: #{tpu_custom_call.1} parent=15 // pred_fallthru
          _
        // Predicated region
        $region25: #{tpu_custom_call.1} parent=15 // pred_check
          %p254 = pneg %p122
        $region26: #{tpu_custom_call.1} parent=15 // pred_check_branch
          %256 = sbr.rel (%p254) target = $region28
        $region27: #{tpu_custom_call.1} parent=15 // pred_region
          %s257 = sand.u32 %s23, 1
          %s258 = scalar_lea.sflag [#allocation6], %s257
          %s259 = sand.u32 %s112, 1
          %s260 = smul.addr %s259, 32
          %s261 = scalar_lea.vmem [#allocation7], %s260
          %s262 = smul.u32 4, %s31
          %s264 = ssub.s32 512, 512
          %265 = vsyncadd %s258, %s264
          %s266 = smul.addr %s30, 4
          %s267 = sadd.s32 %s262, %s266
          %s268 = smul.addr %s267, 128
          %s269 = scalar_lea.hbm %s2, %s268
          %s270 = sshll.u32 %s261, 4
          %s271 = int_to_ptr.vmem [resolvable:$true] %s270
          %276 = dma.hbm_to_vmem [thread:$0]  %s269, 512, %s271, %s258, 128, 128, 8
        $region28: #{tpu_custom_call.1} parent=15 // pred_fallthru
          _
      $region16: #{tpu_custom_call.1} parent=5 // pred_fallthru
        _
      %p277 = scmp.le.s32.totalorder 1, %s23
      %p278 = scmp.lt.s32.totalorder %s23, 3
      %p279 = pnand %p277, %p278
      %p280 = pneg %p279
      // Predicated region
      $region29: #{tpu_custom_call.1} parent=5 // pred_check
        _
      $region30: #{tpu_custom_call.1} parent=5 // pred_check_branch
        %282 = sbr.rel (%p279) target = $region32
      $region31: #{tpu_custom_call.1} parent=5 // pred_region
        %s283 = ssub.s32 %s23, 1
        %s284 = sand.u32 %s59, 1
        %s285 = scalar_lea.sflag [#allocation3], %s284
        %s286 = sand.u32 %s59, 1
        %s287 = smul.addr %s286, 32
        %s288 = scalar_lea.vmem [#allocation2], %s287
        // Predicated region
        $region33: #{tpu_custom_call.1} parent=31 // pred_check
          %p289 = pneg %p72
        $region34: #{tpu_custom_call.1} parent=31 // pred_check_branch
          %291 = sbr.rel (%p289) target = $region36
        $region35: #{tpu_custom_call.1} parent=31 // pred_region
          %292 = dma.done %s285, 512
        $region36: #{tpu_custom_call.1} parent=31 // pred_fallthru
          _
        %s293 = sand.u32 %s28, 1
        %s294 = scalar_lea.sflag [#allocation6], %s293
        %s295 = sand.u32 %s87, 1
        %s296 = smul.addr %s295, 32
        %s297 = scalar_lea.vmem [#allocation5], %s296
        // Predicated region
        $region37: #{tpu_custom_call.1} parent=31 // pred_check
          %p298 = pneg %p100
        $region38: #{tpu_custom_call.1} parent=31 // pred_check_branch
          %300 = sbr.rel (%p298) target = $region40
        $region39: #{tpu_custom_call.1} parent=31 // pred_region
          %301 = dma.done %s294, 512
        $region40: #{tpu_custom_call.1} parent=31 // pred_fallthru
          _
        %s302 = sand.u32 %s28, 1
        %s303 = scalar_lea.sflag [#allocation6], %s302
        %s304 = sand.u32 %s115, 1
        %s305 = smul.addr %s304, 32
        %s306 = scalar_lea.vmem [#allocation7], %s305
        // Predicated region
        $region41: #{tpu_custom_call.1} parent=31 // pred_check
          %p307 = pneg %p128
        $region42: #{tpu_custom_call.1} parent=31 // pred_check_branch
          %309 = sbr.rel (%p307) target = $region44
        $region43: #{tpu_custom_call.1} parent=31 // pred_region
          %310 = dma.done %s303, 512
        $region44: #{tpu_custom_call.1} parent=31 // pred_fallthru
          _
        %s311 = sand.u32 %s59, 1
        %s312 = scalar_lea.sflag [#allocation3], %s311
        %s313 = sand.u32 %s59, 1
        %s314 = smul.addr %s313, 32
        %s315 = scalar_lea.vmem [#allocation2], %s314
        %p316 = pneg %p72
        %p317 = pneg %p69
        %s318 = sand.u32 %s28, 1
        %s319 = scalar_lea.sflag [#allocation6], %s318
        %s320 = sand.u32 %s87, 1
        %s321 = smul.addr %s320, 32
        %s322 = scalar_lea.vmem [#allocation5], %s321
        %p323 = pneg %p100
        %p324 = pneg %p97
        %s325 = sand.u32 %s28, 1
        %s326 = scalar_lea.sflag [#allocation6], %s325
        %s327 = sand.u32 %s115, 1
        %s328 = smul.addr %s327, 32
        %s329 = scalar_lea.vmem [#allocation7], %s328
        %p330 = pneg %p128
        %p331 = pneg %p125
        %p332 = pneg %p158
        %p333 = pneg %p155
        %s334 = sand.u32 %s145, 1
        %s335 = scalar_lea.sflag [#allocation4], %s334
        %s336 = sand.u32 %s145, 1
        %s337 = smul.addr %s336, 32
        %s338 = scalar_lea.vmem [#allocation8], %s337
        %p339 = pneg %p188
        %p340 = pneg %p185
        %s341 = sand.u32 %s175, 1
        %s342 = scalar_lea.sflag [#allocation10], %s341
        %s343 = sand.u32 %s175, 1
        %s344 = smul.addr %s343, 32
        %s345 = scalar_lea.vmem [#allocation9], %s344
        %s346 = smul.u32 4, %s34
        %s347 = smul.u32 4, %s34
        %s348 = smul.u32 4, %s34
        %s349 = smul.u32 4, %s34
        %s350 = smul.u32 4, %s34
        %v351 = vld [vmem:[%s288] sm:$0xff]
        %v352 = vld [vmem:[%s288 + $0x8] sm:$0xff]
        %v353 = vld [vmem:[%s288 + $0x10] sm:$0xff]
        %v354 = vld [vmem:[%s288 + $0x18] sm:$0xff]
        %v355 = vmul.f32 %v351, 0.17677669
        %v356 = vmul.f32 %v352, 0.17677669
        %v357 = vmul.f32 %v353, 0.17677669
        %v358 = vmul.f32 %v354, 0.17677669
        %v359 = vld [vmem:[%s297] sm:$0xff]
        %v360 = vld [vmem:[%s297 + $0x8] sm:$0xff]
        %v361 = vld [vmem:[%s297 + $0x10] sm:$0xff]
        %v362 = vld [vmem:[%s297 + $0x18] sm:$0xff]
        %v363 = vld [vmem:[%s306] sm:$0xff]
        %v364 = vld [vmem:[%s306 + $0x8] sm:$0xff]
        %v365 = vld [vmem:[%s306 + $0x10] sm:$0xff]
        %v366 = vld [vmem:[%s306 + $0x18] sm:$0xff]
        %vm367 = vcmask 261120
        %v369 = vsel %vm367, %v355, 0
        %v372 = vsel %vm367, %v359, 0
        %374 = vmatprep.subr.mxu0 0.0
        %375 = vmatpush1.xpose.msra.mxu0 0.0
        %376 = vmatprep.subr.mxu0 0.0
        %377 = vmatpush1.xpose.msra.mxu0 0.0
        %378 = vmatprep.subr.mxu0 0.0
        %379 = vmatpush1.xpose.msra.mxu0 0.0
        %380 = vmatprep.subr.mxu0 0.0
        %381 = vmatpush1.xpose.msra.mxu0 0.0
        %382 = vmatprep.subr.mxu0 0.0
        %383 = vmatpush1.xpose.msra.mxu0 0.0
        %384 = vmatprep.subr.mxu0 0.0
        %385 = vmatpush1.xpose.msra.mxu0 0.0
        %386 = vmatprep.subr.mxu0 0.0
        %387 = vmatpush1.xpose.msra.mxu0 0.0
        %388 = vmatprep.subr.mxu0 0.0
        %389 = vmatpush1.xpose.msra.mxu0 0.0
        %390 = vmatprep.subr.mxu0 0.0
        %391 = vmatpush1.xpose.msra.mxu0 0.0
        %392 = vmatprep.subr.mxu0 0.0
        %393 = vmatpush1.xpose.msra.mxu0 0.0
        %394 = vmatprep.subr.mxu0 0.0
        %395 = vmatpush1.xpose.msra.mxu0 0.0
        %396 = vmatprep.subr.mxu0 0.0
        %397 = vmatpush1.xpose.msra.mxu0 0.0
        %398 = vmatprep.subr.mxu0 0.0
        %399 = vmatpush1.xpose.msra.mxu0 0.0
        %400 = vmatprep.subr.mxu0 0.0
        %401 = vmatpush1.xpose.msra.mxu0 0.0
        %402 = vmatprep.subr.mxu0 0.0
        %403 = vmatpush1.xpose.msra.mxu0 0.0
        %404 = vmatprep.subr.mxu0 0.0
        %405 = vmatpush1.xpose.msra.mxu0 %v372
        %406 = vmatprep.subr.mxu0 0.0
        %407 = vmatpush2.xpose.msra.mxu0 0.0
        %408 = vmatprep.subr.mxu0 0.0
        %409 = vmatpush2.xpose.msra.mxu0 0.0
        %410 = vmatprep.subr.mxu0 0.0
        %411 = vmatpush2.xpose.msra.mxu0 0.0
        %412 = vmatprep.subr.mxu0 0.0
        %413 = vmatpush2.xpose.msra.mxu0 0.0
        %414 = vmatprep.subr.mxu0 0.0
        %415 = vmatpush2.xpose.msra.mxu0 0.0
        %416 = vmatprep.subr.mxu0 0.0
        %417 = vmatpush2.xpose.msra.mxu0 0.0
        %418 = vmatprep.subr.mxu0 0.0
        %419 = vmatpush2.xpose.msra.mxu0 0.0
        %420 = vmatprep.subr.mxu0 0.0
        %421 = vmatpush2.xpose.msra.mxu0 0.0
        %422 = vmatprep.subr.mxu0 0.0
        %423 = vmatpush2.xpose.msra.mxu0 0.0
        %424 = vmatprep.subr.mxu0 0.0
        %425 = vmatpush2.xpose.msra.mxu0 0.0
        %426 = vmatprep.subr.mxu0 0.0
        %427 = vmatpush2.xpose.msra.mxu0 0.0
        %428 = vmatprep.subr.mxu0 0.0
        %429 = vmatpush2.xpose.msra.mxu0 0.0
        %430 = vmatprep.subr.mxu0 0.0
        %431 = vmatpush2.xpose.msra.mxu0 0.0
        %432 = vmatprep.subr.mxu0 0.0
        %433 = vmatpush2.xpose.msra.mxu0 0.0
        %434 = vmatprep.subr.mxu0 0.0
        %435 = vmatpush2.xpose.msra.mxu0 0.0
        %436 = vmatprep.subr.mxu0 0.0
        %437 = vmatpush2.xpose.msra.mxu0 0.0
        %438 = vmatprep.mubr.f32.mxu0 0.0
        %439 = vmatmul.mubr.f32.gmra.mxu0 %v369
        %v440 = vpop.f32.mrf.mxu0
        %v441 = vadd.f32 0.0, %v440
        %v442 = vpop.f32.mrf.mxu0
        %443 = vdwg.mxu0
        %v445 = vsel %vm367, %v356, 0
        %v448 = vsel %vm367, %v360, 0
        %450 = vmatprep.subr.mxu0 0.0
        %451 = vmatpush1.xpose.msra.mxu0 0.0
        %452 = vmatprep.subr.mxu0 0.0
        %453 = vmatpush1.xpose.msra.mxu0 0.0
        %454 = vmatprep.subr.mxu0 0.0
        %455 = vmatpush1.xpose.msra.mxu0 0.0
        %456 = vmatprep.subr.mxu0 0.0
        %457 = vmatpush1.xpose.msra.mxu0 0.0
        %458 = vmatprep.subr.mxu0 0.0
        %459 = vmatpush1.xpose.msra.mxu0 0.0
        %460 = vmatprep.subr.mxu0 0.0
        %461 = vmatpush1.xpose.msra.mxu0 0.0
        %462 = vmatprep.subr.mxu0 0.0
        %463 = vmatpush1.xpose.msra.mxu0 0.0
        %464 = vmatprep.subr.mxu0 0.0
        %465 = vmatpush1.xpose.msra.mxu0 0.0
        %466 = vmatprep.subr.mxu0 0.0
        %467 = vmatpush1.xpose.msra.mxu0 0.0
        %468 = vmatprep.subr.mxu0 0.0
        %469 = vmatpush1.xpose.msra.mxu0 0.0
        %470 = vmatprep.subr.mxu0 0.0
        %471 = vmatpush1.xpose.msra.mxu0 0.0
        %472 = vmatprep.subr.mxu0 0.0
        %473 = vmatpush1.xpose.msra.mxu0 0.0
        %474 = vmatprep.subr.mxu0 0.0
        %475 = vmatpush1.xpose.msra.mxu0 0.0
        %476 = vmatprep.subr.mxu0 0.0
        %477 = vmatpush1.xpose.msra.mxu0 0.0
        %478 = vmatprep.subr.mxu0 0.0
        %479 = vmatpush1.xpose.msra.mxu0 0.0
        %480 = vmatprep.subr.mxu0 0.0
        %481 = vmatpush1.xpose.msra.mxu0 %v448
        %482 = vmatprep.subr.mxu0 0.0
        %483 = vmatpush2.xpose.msra.mxu0 0.0
        %484 = vmatprep.subr.mxu0 0.0
        %485 = vmatpush2.xpose.msra.mxu0 0.0
        %486 = vmatprep.subr.mxu0 0.0
        %487 = vmatpush2.xpose.msra.mxu0 0.0
        %488 = vmatprep.subr.mxu0 0.0
        %489 = vmatpush2.xpose.msra.mxu0 0.0
        %490 = vmatprep.subr.mxu0 0.0
        %491 = vmatpush2.xpose.msra.mxu0 0.0
        %492 = vmatprep.subr.mxu0 0.0
        %493 = vmatpush2.xpose.msra.mxu0 0.0
        %494 = vmatprep.subr.mxu0 0.0
        %495 = vmatpush2.xpose.msra.mxu0 0.0
        %496 = vmatprep.subr.mxu0 0.0
        %497 = vmatpush2.xpose.msra.mxu0 0.0
        %498 = vmatprep.subr.mxu0 0.0
        %499 = vmatpush2.xpose.msra.mxu0 0.0
        %500 = vmatprep.subr.mxu0 0.0
        %501 = vmatpush2.xpose.msra.mxu0 0.0
        %502 = vmatprep.subr.mxu0 0.0
        %503 = vmatpush2.xpose.msra.mxu0 0.0
        %504 = vmatprep.subr.mxu0 0.0
        %505 = vmatpush2.xpose.msra.mxu0 0.0
        %506 = vmatprep.subr.mxu0 0.0
        %507 = vmatpush2.xpose.msra.mxu0 0.0
        %508 = vmatprep.subr.mxu0 0.0
        %509 = vmatpush2.xpose.msra.mxu0 0.0
        %510 = vmatprep.subr.mxu0 0.0
        %511 = vmatpush2.xpose.msra.mxu0 0.0
        %512 = vmatprep.subr.mxu0 0.0
        %513 = vmatpush2.xpose.msra.mxu0 0.0
        %514 = vmatprep.mubr.f32.mxu0 0.0
        %515 = vmatmul.mubr.f32.gmra.mxu0 %v445
        %v516 = vpop.f32.mrf.mxu0
        %v517 = vadd.f32 0.0, %v516
        %v518 = vpop.f32.mrf.mxu0
        %519 = vdwg.mxu0
        %v521 = vsel %vm367, %v357, 0
        %v524 = vsel %vm367, %v361, 0
        %526 = vmatprep.subr.mxu0 0.0
        %527 = vmatpush1.xpose.msra.mxu0 0.0
        %528 = vmatprep.subr.mxu0 0.0
        %529 = vmatpush1.xpose.msra.mxu0 0.0
        %530 = vmatprep.subr.mxu0 0.0
        %531 = vmatpush1.xpose.msra.mxu0 0.0
        %532 = vmatprep.subr.mxu0 0.0
        %533 = vmatpush1.xpose.msra.mxu0 0.0
        %534 = vmatprep.subr.mxu0 0.0
        %535 = vmatpush1.xpose.msra.mxu0 0.0
        %536 = vmatprep.subr.mxu0 0.0
        %537 = vmatpush1.xpose.msra.mxu0 0.0
        %538 = vmatprep.subr.mxu0 0.0
        %539 = vmatpush1.xpose.msra.mxu0 0.0
        %540 = vmatprep.subr.mxu0 0.0
        %541 = vmatpush1.xpose.msra.mxu0 0.0
        %542 = vmatprep.subr.mxu0 0.0
        %543 = vmatpush1.xpose.msra.mxu0 0.0
        %544 = vmatprep.subr.mxu0 0.0
        %545 = vmatpush1.xpose.msra.mxu0 0.0
        %546 = vmatprep.subr.mxu0 0.0
        %547 = vmatpush1.xpose.msra.mxu0 0.0
        %548 = vmatprep.subr.mxu0 0.0
        %549 = vmatpush1.xpose.msra.mxu0 0.0
        %550 = vmatprep.subr.mxu0 0.0
        %551 = vmatpush1.xpose.msra.mxu0 0.0
        %552 = vmatprep.subr.mxu0 0.0
        %553 = vmatpush1.xpose.msra.mxu0 0.0
        %554 = vmatprep.subr.mxu0 0.0
        %555 = vmatpush1.xpose.msra.mxu0 0.0
        %556 = vmatprep.subr.mxu0 0.0
        %557 = vmatpush1.xpose.msra.mxu0 %v524
        %558 = vmatprep.subr.mxu0 0.0
        %559 = vmatpush2.xpose.msra.mxu0 0.0
        %560 = vmatprep.subr.mxu0 0.0
        %561 = vmatpush2.xpose.msra.mxu0 0.0
        %562 = vmatprep.subr.mxu0 0.0
        %563 = vmatpush2.xpose.msra.mxu0 0.0
        %564 = vmatprep.subr.mxu0 0.0
        %565 = vmatpush2.xpose.msra.mxu0 0.0
        %566 = vmatprep.subr.mxu0 0.0
        %567 = vmatpush2.xpose.msra.mxu0 0.0
        %568 = vmatprep.subr.mxu0 0.0
        %569 = vmatpush2.xpose.msra.mxu0 0.0
        %570 = vmatprep.subr.mxu0 0.0
        %571 = vmatpush2.xpose.msra.mxu0 0.0
        %572 = vmatprep.subr.mxu0 0.0
        %573 = vmatpush2.xpose.msra.mxu0 0.0
        %574 = vmatprep.subr.mxu0 0.0
        %575 = vmatpush2.xpose.msra.mxu0 0.0
        %576 = vmatprep.subr.mxu0 0.0
        %577 = vmatpush2.xpose.msra.mxu0 0.0
        %578 = vmatprep.subr.mxu0 0.0
        %579 = vmatpush2.xpose.msra.mxu0 0.0
        %580 = vmatprep.subr.mxu0 0.0
        %581 = vmatpush2.xpose.msra.mxu0 0.0
        %582 = vmatprep.subr.mxu0 0.0
        %583 = vmatpush2.xpose.msra.mxu0 0.0
        %584 = vmatprep.subr.mxu0 0.0
        %585 = vmatpush2.xpose.msra.mxu0 0.0
        %586 = vmatprep.subr.mxu0 0.0
        %587 = vmatpush2.xpose.msra.mxu0 0.0
        %588 = vmatprep.subr.mxu0 0.0
        %589 = vmatpush2.xpose.msra.mxu0 0.0
        %590 = vmatprep.mubr.f32.mxu0 0.0
        %591 = vmatmul.mubr.f32.gmra.mxu0 %v521
        %v592 = vpop.f32.mrf.mxu0
        %v593 = vadd.f32 0.0, %v592
        %v594 = vpop.f32.mrf.mxu0
        %595 = vdwg.mxu0
        %v597 = vsel %vm367, %v358, 0
        %v600 = vsel %vm367, %v362, 0
        %602 = vmatprep.subr.mxu0 0.0
        %603 = vmatpush1.xpose.msra.mxu0 0.0
        %604 = vmatprep.subr.mxu0 0.0
        %605 = vmatpush1.xpose.msra.mxu0 0.0
        %606 = vmatprep.subr.mxu0 0.0
        %607 = vmatpush1.xpose.msra.mxu0 0.0
        %608 = vmatprep.subr.mxu0 0.0
        %609 = vmatpush1.xpose.msra.mxu0 0.0
        %610 = vmatprep.subr.mxu0 0.0
        %611 = vmatpush1.xpose.msra.mxu0 0.0
        %612 = vmatprep.subr.mxu0 0.0
        %613 = vmatpush1.xpose.msra.mxu0 0.0
        %614 = vmatprep.subr.mxu0 0.0
        %615 = vmatpush1.xpose.msra.mxu0 0.0
        %616 = vmatprep.subr.mxu0 0.0
        %617 = vmatpush1.xpose.msra.mxu0 0.0
        %618 = vmatprep.subr.mxu0 0.0
        %619 = vmatpush1.xpose.msra.mxu0 0.0
        %620 = vmatprep.subr.mxu0 0.0
        %621 = vmatpush1.xpose.msra.mxu0 0.0
        %622 = vmatprep.subr.mxu0 0.0
        %623 = vmatpush1.xpose.msra.mxu0 0.0
        %624 = vmatprep.subr.mxu0 0.0
        %625 = vmatpush1.xpose.msra.mxu0 0.0
        %626 = vmatprep.subr.mxu0 0.0
        %627 = vmatpush1.xpose.msra.mxu0 0.0
        %628 = vmatprep.subr.mxu0 0.0
        %629 = vmatpush1.xpose.msra.mxu0 0.0
        %630 = vmatprep.subr.mxu0 0.0
        %631 = vmatpush1.xpose.msra.mxu0 0.0
        %632 = vmatprep.subr.mxu0 0.0
        %633 = vmatpush1.xpose.msra.mxu0 %v600
        %634 = vmatprep.subr.mxu0 0.0
        %635 = vmatpush2.xpose.msra.mxu0 0.0
        %636 = vmatprep.subr.mxu0 0.0
        %637 = vmatpush2.xpose.msra.mxu0 0.0
        %638 = vmatprep.subr.mxu0 0.0
        %639 = vmatpush2.xpose.msra.mxu0 0.0
        %640 = vmatprep.subr.mxu0 0.0
        %641 = vmatpush2.xpose.msra.mxu0 0.0
        %642 = vmatprep.subr.mxu0 0.0
        %643 = vmatpush2.xpose.msra.mxu0 0.0
        %644 = vmatprep.subr.mxu0 0.0
        %645 = vmatpush2.xpose.msra.mxu0 0.0
        %646 = vmatprep.subr.mxu0 0.0
        %647 = vmatpush2.xpose.msra.mxu0 0.0
        %648 = vmatprep.subr.mxu0 0.0
        %649 = vmatpush2.xpose.msra.mxu0 0.0
        %650 = vmatprep.subr.mxu0 0.0
        %651 = vmatpush2.xpose.msra.mxu0 0.0
        %652 = vmatprep.subr.mxu0 0.0
        %653 = vmatpush2.xpose.msra.mxu0 0.0
        %654 = vmatprep.subr.mxu0 0.0
        %655 = vmatpush2.xpose.msra.mxu0 0.0
        %656 = vmatprep.subr.mxu0 0.0
        %657 = vmatpush2.xpose.msra.mxu0 0.0
        %658 = vmatprep.subr.mxu0 0.0
        %659 = vmatpush2.xpose.msra.mxu0 0.0
        %660 = vmatprep.subr.mxu0 0.0
        %661 = vmatpush2.xpose.msra.mxu0 0.0
        %662 = vmatprep.subr.mxu0 0.0
        %663 = vmatpush2.xpose.msra.mxu0 0.0
        %664 = vmatprep.subr.mxu0 0.0
        %665 = vmatpush2.xpose.msra.mxu0 0.0
        %666 = vmatprep.mubr.f32.mxu0 0.0
        %667 = vmatmul.mubr.f32.gmra.mxu0 %v597
        %v668 = vpop.f32.mrf.mxu0
        %v669 = vadd.f32 0.0, %v668
        %v670 = vpop.f32.mrf.mxu0
        %671 = vdwg.mxu0
        %vm672 = vcmask 64512
        %v673 = vsel %vm672, %v441, -inf
        %674 = vmax.xlane.f32.xlu0 %v673
        %v675 = vpop.xlane.xlu0 %674
        %v676 = vsel %vm672, %v517, -inf
        %677 = vmax.xlane.f32.xlu0 %v676
        %v678 = vpop.xlane.xlu0 %677
        %v679 = vsel %vm672, %v593, -inf
        %680 = vmax.xlane.f32.xlu0 %v679
        %v681 = vpop.xlane.xlu0 %680
        %v682 = vsel %vm672, %v669, -inf
        %683 = vmax.xlane.f32.xlu0 %v682
        %v684 = vpop.xlane.xlu0 %683
        %v685 = vsub.f32 %v441, %v675
        %v686 = vsub.f32 %v517, %v678
        %v687 = vsub.f32 %v593, %v681
        %v688 = vsub.f32 %v669, %v684
        %v689 = vmul.f32 %v685, 1.442695
        %v690 = vpow.pop %v689
        %v691 = vmul.f32 %v686, 1.442695
        %v692 = vpow.pop %v691
        %v693 = vmul.f32 %v687, 1.442695
        %v694 = vpow.pop %v693
        %v695 = vmul.f32 %v688, 1.442695
        %v696 = vpow.pop %v695
        %v697 = vsel %vm672, %v690, 0.0
        %698 = vadd.xlane.f32.xlu0 %v697
        %v699 = vpop.xlane.xlu0 %698
        %v700 = vsel %vm672, %v692, 0.0
        %701 = vadd.xlane.f32.xlu0 %v700
        %v702 = vpop.xlane.xlu0 %701
        %v703 = vsel %vm672, %v694, 0.0
        %704 = vadd.xlane.f32.xlu0 %v703
        %v705 = vpop.xlane.xlu0 %704
        %v706 = vsel %vm672, %v696, 0.0
        %707 = vadd.xlane.f32.xlu0 %v706
        %v708 = vpop.xlane.xlu0 %707
        %v709 = vrcp.pop %v699
        %v710 = vmul.f32 1.0, %v709
        %v711 = vrcp.pop %v702
        %v712 = vmul.f32 1.0, %v711
        %v713 = vrcp.pop %v705
        %v714 = vmul.f32 1.0, %v713
        %v715 = vrcp.pop %v708
        %v716 = vmul.f32 1.0, %v715
        %v717 = vmul.f32 %v690, %v710
        %v718 = vmul.f32 %v692, %v712
        %v719 = vmul.f32 %v694, %v714
        %v720 = vmul.f32 %v696, %v716
        %v722 = vsel %vm672, %v717, 0
        %724 = vmatprep.subr.mxu0 0.0
        %725 = vmatpush1.msra.mxu0 0.0
        %726 = vmatprep.subr.mxu0 0.0
        %727 = vmatpush1.msra.mxu0 0.0
        %728 = vmatprep.subr.mxu0 0.0
        %729 = vmatpush1.msra.mxu0 0.0
        %730 = vmatprep.subr.mxu0 0.0
        %731 = vmatpush1.msra.mxu0 0.0
        %732 = vmatprep.subr.mxu0 0.0
        %733 = vmatpush1.msra.mxu0 0.0
        %734 = vmatprep.subr.mxu0 0.0
        %735 = vmatpush1.msra.mxu0 0.0
        %736 = vmatprep.subr.mxu0 0.0
        %737 = vmatpush1.msra.mxu0 0.0
        %738 = vmatprep.subr.mxu0 0.0
        %739 = vmatpush1.msra.mxu0 0.0
        %740 = vmatprep.subr.mxu0 0.0
        %741 = vmatpush1.msra.mxu0 0.0
        %742 = vmatprep.subr.mxu0 0.0
        %743 = vmatpush1.msra.mxu0 0.0
        %744 = vmatprep.subr.mxu0 0.0
        %745 = vmatpush1.msra.mxu0 0.0
        %746 = vmatprep.subr.mxu0 0.0
        %747 = vmatpush1.msra.mxu0 0.0
        %748 = vmatprep.subr.mxu0 0.0
        %749 = vmatpush1.msra.mxu0 0.0
        %750 = vmatprep.subr.mxu0 0.0
        %751 = vmatpush1.msra.mxu0 0.0
        %752 = vmatprep.subr.mxu0 0.0
        %753 = vmatpush1.msra.mxu0 0.0
        %754 = vmatprep.subr.mxu0 0.0
        %755 = vmatpush1.msra.mxu0 %v363
        %756 = vmatprep.subr.mxu0 0.0
        %757 = vmatpush2.msra.mxu0 0.0
        %758 = vmatprep.subr.mxu0 0.0
        %759 = vmatpush2.msra.mxu0 0.0
        %760 = vmatprep.subr.mxu0 0.0
        %761 = vmatpush2.msra.mxu0 0.0
        %762 = vmatprep.subr.mxu0 0.0
        %763 = vmatpush2.msra.mxu0 0.0
        %764 = vmatprep.subr.mxu0 0.0
        %765 = vmatpush2.msra.mxu0 0.0
        %766 = vmatprep.subr.mxu0 0.0
        %767 = vmatpush2.msra.mxu0 0.0
        %768 = vmatprep.subr.mxu0 0.0
        %769 = vmatpush2.msra.mxu0 0.0
        %770 = vmatprep.subr.mxu0 0.0
        %771 = vmatpush2.msra.mxu0 0.0
        %772 = vmatprep.subr.mxu0 0.0
        %773 = vmatpush2.msra.mxu0 0.0
        %774 = vmatprep.subr.mxu0 0.0
        %775 = vmatpush2.msra.mxu0 0.0
        %776 = vmatprep.subr.mxu0 0.0
        %777 = vmatpush2.msra.mxu0 0.0
        %778 = vmatprep.subr.mxu0 0.0
        %779 = vmatpush2.msra.mxu0 0.0
        %780 = vmatprep.subr.mxu0 0.0
        %781 = vmatpush2.msra.mxu0 0.0
        %782 = vmatprep.subr.mxu0 0.0
        %783 = vmatpush2.msra.mxu0 0.0
        %784 = vmatprep.subr.mxu0 0.0
        %785 = vmatpush2.msra.mxu0 0.0
        %786 = vmatprep.subr.mxu0 0.0
        %787 = vmatpush2.msra.mxu0 0.0
        %788 = vmatprep.mubr.f32.mxu0 0.0
        %789 = vmatmul.mubr.f32.gmra.mxu0 %v722
        %v790 = vpop.f32.mrf.mxu0
        %v791 = vadd.f32 0.0, %v790
        %v792 = vpop.f32.mrf.mxu0
        %793 = vdwg.mxu0
        %v795 = vsel %vm672, %v718, 0
        %797 = vmatprep.subr.mxu0 0.0
        %798 = vmatpush1.msra.mxu0 0.0
        %799 = vmatprep.subr.mxu0 0.0
        %800 = vmatpush1.msra.mxu0 0.0
        %801 = vmatprep.subr.mxu0 0.0
        %802 = vmatpush1.msra.mxu0 0.0
        %803 = vmatprep.subr.mxu0 0.0
        %804 = vmatpush1.msra.mxu0 0.0
        %805 = vmatprep.subr.mxu0 0.0
        %806 = vmatpush1.msra.mxu0 0.0
        %807 = vmatprep.subr.mxu0 0.0
        %808 = vmatpush1.msra.mxu0 0.0
        %809 = vmatprep.subr.mxu0 0.0
        %810 = vmatpush1.msra.mxu0 0.0
        %811 = vmatprep.subr.mxu0 0.0
        %812 = vmatpush1.msra.mxu0 0.0
        %813 = vmatprep.subr.mxu0 0.0
        %814 = vmatpush1.msra.mxu0 0.0
        %815 = vmatprep.subr.mxu0 0.0
        %816 = vmatpush1.msra.mxu0 0.0
        %817 = vmatprep.subr.mxu0 0.0
        %818 = vmatpush1.msra.mxu0 0.0
        %819 = vmatprep.subr.mxu0 0.0
        %820 = vmatpush1.msra.mxu0 0.0
        %821 = vmatprep.subr.mxu0 0.0
        %822 = vmatpush1.msra.mxu0 0.0
        %823 = vmatprep.subr.mxu0 0.0
        %824 = vmatpush1.msra.mxu0 0.0
        %825 = vmatprep.subr.mxu0 0.0
        %826 = vmatpush1.msra.mxu0 0.0
        %827 = vmatprep.subr.mxu0 0.0
        %828 = vmatpush1.msra.mxu0 %v364
        %829 = vmatprep.subr.mxu0 0.0
        %830 = vmatpush2.msra.mxu0 0.0
        %831 = vmatprep.subr.mxu0 0.0
        %832 = vmatpush2.msra.mxu0 0.0
        %833 = vmatprep.subr.mxu0 0.0
        %834 = vmatpush2.msra.mxu0 0.0
        %835 = vmatprep.subr.mxu0 0.0
        %836 = vmatpush2.msra.mxu0 0.0
        %837 = vmatprep.subr.mxu0 0.0
        %838 = vmatpush2.msra.mxu0 0.0
        %839 = vmatprep.subr.mxu0 0.0
        %840 = vmatpush2.msra.mxu0 0.0
        %841 = vmatprep.subr.mxu0 0.0
        %842 = vmatpush2.msra.mxu0 0.0
        %843 = vmatprep.subr.mxu0 0.0
        %844 = vmatpush2.msra.mxu0 0.0
        %845 = vmatprep.subr.mxu0 0.0
        %846 = vmatpush2.msra.mxu0 0.0
        %847 = vmatprep.subr.mxu0 0.0
        %848 = vmatpush2.msra.mxu0 0.0
        %849 = vmatprep.subr.mxu0 0.0
        %850 = vmatpush2.msra.mxu0 0.0
        %851 = vmatprep.subr.mxu0 0.0
        %852 = vmatpush2.msra.mxu0 0.0
        %853 = vmatprep.subr.mxu0 0.0
        %854 = vmatpush2.msra.mxu0 0.0
        %855 = vmatprep.subr.mxu0 0.0
        %856 = vmatpush2.msra.mxu0 0.0
        %857 = vmatprep.subr.mxu0 0.0
        %858 = vmatpush2.msra.mxu0 0.0
        %859 = vmatprep.subr.mxu0 0.0
        %860 = vmatpush2.msra.mxu0 0.0
        %861 = vmatprep.mubr.f32.mxu0 0.0
        %862 = vmatmul.mubr.f32.gmra.mxu0 %v795
        %v863 = vpop.f32.mrf.mxu0
        %v864 = vadd.f32 0.0, %v863
        %v865 = vpop.f32.mrf.mxu0
        %866 = vdwg.mxu0
        %v868 = vsel %vm672, %v719, 0
        %870 = vmatprep.subr.mxu0 0.0
        %871 = vmatpush1.msra.mxu0 0.0
        %872 = vmatprep.subr.mxu0 0.0
        %873 = vmatpush1.msra.mxu0 0.0
        %874 = vmatprep.subr.mxu0 0.0
        %875 = vmatpush1.msra.mxu0 0.0
        %876 = vmatprep.subr.mxu0 0.0
        %877 = vmatpush1.msra.mxu0 0.0
        %878 = vmatprep.subr.mxu0 0.0
        %879 = vmatpush1.msra.mxu0 0.0
        %880 = vmatprep.subr.mxu0 0.0
        %881 = vmatpush1.msra.mxu0 0.0
        %882 = vmatprep.subr.mxu0 0.0
        %883 = vmatpush1.msra.mxu0 0.0
        %884 = vmatprep.subr.mxu0 0.0
        %885 = vmatpush1.msra.mxu0 0.0
        %886 = vmatprep.subr.mxu0 0.0
        %887 = vmatpush1.msra.mxu0 0.0
        %888 = vmatprep.subr.mxu0 0.0
        %889 = vmatpush1.msra.mxu0 0.0
        %890 = vmatprep.subr.mxu0 0.0
        %891 = vmatpush1.msra.mxu0 0.0
        %892 = vmatprep.subr.mxu0 0.0
        %893 = vmatpush1.msra.mxu0 0.0
        %894 = vmatprep.subr.mxu0 0.0
        %895 = vmatpush1.msra.mxu0 0.0
        %896 = vmatprep.subr.mxu0 0.0
        %897 = vmatpush1.msra.mxu0 0.0
        %898 = vmatprep.subr.mxu0 0.0
        %899 = vmatpush1.msra.mxu0 0.0
        %900 = vmatprep.subr.mxu0 0.0
        %901 = vmatpush1.msra.mxu0 %v365
        %902 = vmatprep.subr.mxu0 0.0
        %903 = vmatpush2.msra.mxu0 0.0
        %904 = vmatprep.subr.mxu0 0.0
        %905 = vmatpush2.msra.mxu0 0.0
        %906 = vmatprep.subr.mxu0 0.0
        %907 = vmatpush2.msra.mxu0 0.0
        %908 = vmatprep.subr.mxu0 0.0
        %909 = vmatpush2.msra.mxu0 0.0
        %910 = vmatprep.subr.mxu0 0.0
        %911 = vmatpush2.msra.mxu0 0.0
        %912 = vmatprep.subr.mxu0 0.0
        %913 = vmatpush2.msra.mxu0 0.0
        %914 = vmatprep.subr.mxu0 0.0
        %915 = vmatpush2.msra.mxu0 0.0
        %916 = vmatprep.subr.mxu0 0.0
        %917 = vmatpush2.msra.mxu0 0.0
        %918 = vmatprep.subr.mxu0 0.0
        %919 = vmatpush2.msra.mxu0 0.0
        %920 = vmatprep.subr.mxu0 0.0
        %921 = vmatpush2.msra.mxu0 0.0
        %922 = vmatprep.subr.mxu0 0.0
        %923 = vmatpush2.msra.mxu0 0.0
        %924 = vmatprep.subr.mxu0 0.0
        %925 = vmatpush2.msra.mxu0 0.0
        %926 = vmatprep.subr.mxu0 0.0
        %927 = vmatpush2.msra.mxu0 0.0
        %928 = vmatprep.subr.mxu0 0.0
        %929 = vmatpush2.msra.mxu0 0.0
        %930 = vmatprep.subr.mxu0 0.0
        %931 = vmatpush2.msra.mxu0 0.0
        %932 = vmatprep.subr.mxu0 0.0
        %933 = vmatpush2.msra.mxu0 0.0
        %934 = vmatprep.mubr.f32.mxu0 0.0
        %935 = vmatmul.mubr.f32.gmra.mxu0 %v868
        %v936 = vpop.f32.mrf.mxu0
        %v937 = vadd.f32 0.0, %v936
        %v938 = vpop.f32.mrf.mxu0
        %939 = vdwg.mxu0
        %v941 = vsel %vm672, %v720, 0
        %943 = vmatprep.subr.mxu0 0.0
        %944 = vmatpush1.msra.mxu0 0.0
        %945 = vmatprep.subr.mxu0 0.0
        %946 = vmatpush1.msra.mxu0 0.0
        %947 = vmatprep.subr.mxu0 0.0
        %948 = vmatpush1.msra.mxu0 0.0
        %949 = vmatprep.subr.mxu0 0.0
        %950 = vmatpush1.msra.mxu0 0.0
        %951 = vmatprep.subr.mxu0 0.0
        %952 = vmatpush1.msra.mxu0 0.0
        %953 = vmatprep.subr.mxu0 0.0
        %954 = vmatpush1.msra.mxu0 0.0
        %955 = vmatprep.subr.mxu0 0.0
        %956 = vmatpush1.msra.mxu0 0.0
        %957 = vmatprep.subr.mxu0 0.0
        %958 = vmatpush1.msra.mxu0 0.0
        %959 = vmatprep.subr.mxu0 0.0
        %960 = vmatpush1.msra.mxu0 0.0
        %961 = vmatprep.subr.mxu0 0.0
        %962 = vmatpush1.msra.mxu0 0.0
        %963 = vmatprep.subr.mxu0 0.0
        %964 = vmatpush1.msra.mxu0 0.0
        %965 = vmatprep.subr.mxu0 0.0
        %966 = vmatpush1.msra.mxu0 0.0
        %967 = vmatprep.subr.mxu0 0.0
        %968 = vmatpush1.msra.mxu0 0.0
        %969 = vmatprep.subr.mxu0 0.0
        %970 = vmatpush1.msra.mxu0 0.0
        %971 = vmatprep.subr.mxu0 0.0
        %972 = vmatpush1.msra.mxu0 0.0
        %973 = vmatprep.subr.mxu0 0.0
        %974 = vmatpush1.msra.mxu0 %v366
        %975 = vmatprep.subr.mxu0 0.0
        %976 = vmatpush2.msra.mxu0 0.0
        %977 = vmatprep.subr.mxu0 0.0
        %978 = vmatpush2.msra.mxu0 0.0
        %979 = vmatprep.subr.mxu0 0.0
        %980 = vmatpush2.msra.mxu0 0.0
        %981 = vmatprep.subr.mxu0 0.0
        %982 = vmatpush2.msra.mxu0 0.0
        %983 = vmatprep.subr.mxu0 0.0
        %984 = vmatpush2.msra.mxu0 0.0
        %985 = vmatprep.subr.mxu0 0.0
        %986 = vmatpush2.msra.mxu0 0.0
        %987 = vmatprep.subr.mxu0 0.0
        %988 = vmatpush2.msra.mxu0 0.0
        %989 = vmatprep.subr.mxu0 0.0
        %990 = vmatpush2.msra.mxu0 0.0
        %991 = vmatprep.subr.mxu0 0.0
        %992 = vmatpush2.msra.mxu0 0.0
        %993 = vmatprep.subr.mxu0 0.0
        %994 = vmatpush2.msra.mxu0 0.0
        %995 = vmatprep.subr.mxu0 0.0
        %996 = vmatpush2.msra.mxu0 0.0
        %997 = vmatprep.subr.mxu0 0.0
        %998 = vmatpush2.msra.mxu0 0.0
        %999 = vmatprep.subr.mxu0 0.0
        %1000 = vmatpush2.msra.mxu0 0.0
        %1001 = vmatprep.subr.mxu0 0.0
        %1002 = vmatpush2.msra.mxu0 0.0
        %1003 = vmatprep.subr.mxu0 0.0
        %1004 = vmatpush2.msra.mxu0 0.0
        %1005 = vmatprep.subr.mxu0 0.0
        %1006 = vmatpush2.msra.mxu0 0.0
        %1007 = vmatprep.mubr.f32.mxu0 0.0
        %1008 = vmatmul.mubr.f32.gmra.mxu0 %v941
        %v1009 = vpop.f32.mrf.mxu0
        %v1010 = vadd.f32 0.0, %v1009
        %v1011 = vpop.f32.mrf.mxu0
        %1012 = vdwg.mxu0
        %1013 = vst.msk [vmem:[%s345] sm:$0xff] %vm672, %v717
        %1014 = vst.msk [vmem:[%s345 + $0x8] sm:$0xff] %vm672, %v718
        %1015 = vst.msk [vmem:[%s345 + $0x10] sm:$0xff] %vm672, %v719
        %1016 = vst.msk [vmem:[%s345 + $0x18] sm:$0xff] %vm672, %v720
        %1017 = vst.msk [vmem:[%s338] sm:$0xff] %vm367, %v791
        %1018 = vst.msk [vmem:[%s338 + $0x8] sm:$0xff] %vm367, %v864
        %1019 = vst.msk [vmem:[%s338 + $0x10] sm:$0xff] %vm367, %v937
        %1020 = vst.msk [vmem:[%s338 + $0x18] sm:$0xff] %vm367, %v1010
        %s1021 = sand.u32 %s145, 1
        %s1022 = scalar_lea.sflag [#allocation4], %s1021
        %s1023 = sand.u32 %s145, 1
        %s1024 = smul.addr %s1023, 32
        %s1025 = scalar_lea.vmem [#allocation8], %s1024
        %s1026 = sand.u32 %s175, 1
        %s1027 = scalar_lea.sflag [#allocation10], %s1026
        %s1028 = sand.u32 %s175, 1
        %s1029 = smul.addr %s1028, 32
        %s1030 = scalar_lea.vmem [#allocation9], %s1029
        // Predicated region
        $region45: #{tpu_custom_call.1} parent=31 // pred_check
          %p1031 = pneg %p155
        $region46: #{tpu_custom_call.1} parent=31 // pred_check_branch
          %1033 = sbr.rel (%p1031) target = $region48
        $region47: #{tpu_custom_call.1} parent=31 // pred_region
          %s1034 = smul.u32 4, %s34
          %s1036 = ssub.s32 512, 512
          %1037 = vsyncadd %s1022, %s1036
          %s1038 = sadd.s32 %s35, %s1034
          %s1039 = smul.addr %s33, 4
          %s1040 = sadd.s32 %s1038, %s1039
          %s1041 = smul.addr %s1040, 128
          %s1042 = scalar_lea.hbm %s3, %s1041
          %s1043 = sshll.u32 %s1025, 4
          %s1044 = int_to_ptr.vmem [resolvable:$true] %s1043
          %1049 = dma.vmem_to_hbm [thread:$0]  %s1044, 512, %s1042, %s1022, 128, 128, 8
        $region48: #{tpu_custom_call.1} parent=31 // pred_fallthru
          _
        // Predicated region
        $region49: #{tpu_custom_call.1} parent=31 // pred_check
          %p1050 = pneg %p185
        $region50: #{tpu_custom_call.1} parent=31 // pred_check_branch
          %1052 = sbr.rel (%p1050) target = $region52
        $region51: #{tpu_custom_call.1} parent=31 // pred_region
          %s1053 = smul.u32 4, %s34
          %s1055 = ssub.s32 512, 512
          %1056 = vsyncadd %s1027, %s1055
          %s1057 = sadd.s32 %s35, %s1053
          %s1058 = smul.addr %s33, 4
          %s1059 = sadd.s32 %s1057, %s1058
          %s1060 = smul.addr %s1059, 128
          %s1061 = scalar_lea.hbm %s4, %s1060
          %s1062 = sshll.u32 %s1030, 4
          %s1063 = int_to_ptr.vmem [resolvable:$true] %s1062
          %1068 = dma.vmem_to_hbm [thread:$0]  %s1063, 512, %s1061, %s1027, 128, 128, 8
        $region52: #{tpu_custom_call.1} parent=31 // pred_fallthru
          _
      $region32: #{tpu_custom_call.1} parent=5 // pred_fallthru
        _
      %p1069 = scmp.le.s32.totalorder 2, %s23
      // Predicated region
      $region53: #{tpu_custom_call.1} parent=5 // pred_check
        %p1070 = pneg %p1069
      $region54: #{tpu_custom_call.1} parent=5 // pred_check_branch
        %1072 = sbr.rel (%p1070) target = $region56
      $region55: #{tpu_custom_call.1} parent=5 // pred_region
        %s1073 = ssub.s32 %s23, 2
        // Predicated region
        $region57: #{tpu_custom_call.1} parent=55 // pred_check
          %p1074 = pneg %p161
        $region58: #{tpu_custom_call.1} parent=55 // pred_check_branch
          %1076 = sbr.rel (%p1074) target = $region60
        $region59: #{tpu_custom_call.1} parent=55 // pred_region
          %s1077 = sand.u32 %s146, 1
          %s1078 = scalar_lea.sflag [#allocation4], %s1077
          %s1079 = sand.u32 %s146, 1
          %s1080 = smul.addr %s1079, 32
          %s1081 = scalar_lea.vmem [#allocation8], %s1080
          %1082 = dma.done %s1078, 512
        $region60: #{tpu_custom_call.1} parent=55 // pred_fallthru
          _
        // Predicated region
        $region61: #{tpu_custom_call.1} parent=55 // pred_check
          %p1083 = pneg %p191
        $region62: #{tpu_custom_call.1} parent=55 // pred_check_branch
          %1085 = sbr.rel (%p1083) target = $region64
        $region63: #{tpu_custom_call.1} parent=55 // pred_region
          %s1086 = sand.u32 %s176, 1
          %s1087 = scalar_lea.sflag [#allocation10], %s1086
          %s1088 = sand.u32 %s176, 1
          %s1089 = smul.addr %s1088, 32
          %s1090 = scalar_lea.vmem [#allocation9], %s1089
          %1091 = dma.done %s1087, 512
        $region64: #{tpu_custom_call.1} parent=55 // pred_fallthru
          _
      $region56: #{tpu_custom_call.1} parent=5 // pred_fallthru
        _
    $region6: #{tpu_custom_call.1} parent=1 // loop_footer
      %s27 = sadd.s32 1, %s23
    $region7: #{tpu_custom_call.1} parent=1 // loop_footer_branch
      %22 = sbr.rel target = $region3
    $region8: #{tpu_custom_call.1} parent=1 // loop_exit
      _
    %1092 = vsyncpa [#allocation3], 1
    %s1093 = scalar_lea.sflag [#allocation3], 1
    %1094 = vsyncpa %s1093, 1
    %1095 = vsyncpa [#allocation6], 1
    %s1096 = scalar_lea.sflag [#allocation6], 1
    %1097 = vsyncpa %s1096, 1
    %1098 = vsyncpa [#allocation4], 1
    %s1099 = scalar_lea.sflag [#allocation4], 1
    %1100 = vsyncpa %s1099, 1
    %1101 = vsyncpa [#allocation10], 1
    %s1102 = scalar_lea.sflag [#allocation10], 1
    %1103 = vsyncpa %s1102, 1

</llo_original>
